<compile_context>
chip_gen: v7x
topology: tpu7x:2x2x1
jax: 0.10.0
libtpu: 0.0.40
codegen_flags: <defaults>
</compile_context>

<pallas_src>
import math
import functools

import jax
import jax.numpy as jnp
from jax.experimental import pallas as pl
from jax.experimental.pallas import tpu as pltpu


# ----------------------------------------------------------------------------
# PE buffer construction (mirrors the nn.Module __init__; plain JAX "glue").
# ----------------------------------------------------------------------------
def build_pe(embed_dim: int, max_len: int) -> jnp.ndarray:
    position = jnp.arange(0, max_len, dtype=jnp.float32)[:, None]          # (L, 1)
    div_term = jnp.exp(
        jnp.arange(0, embed_dim, 2, dtype=jnp.float32)
        * (-math.log(10000.0) / embed_dim)
    )                                                                       # (E/2,)
    pe = jnp.zeros((max_len, embed_dim), dtype=jnp.float32)
    pe = pe.at[:, 0::2].set(jnp.sin(position * div_term))
    pe = pe.at[:, 1::2].set(jnp.cos(position * div_term))
    return pe[None]                                                         # (1, L, E)


# ----------------------------------------------------------------------------
# Stateless counter-based PRNG mixer (lowbias32) — plain jnp uint32 ops only,
# so it lowers on Mosaic and under the TPU interpreter alike.
# ----------------------------------------------------------------------------
def _hash_u32(x):
    x = x ^ (x >> jnp.uint32(16))
    x = x * jnp.uint32(0x7FEB352D)
    x = x ^ (x >> jnp.uint32(15))
    x = x * jnp.uint32(0x846CA68B)
    x = x ^ (x >> jnp.uint32(16))
    return x


# ----------------------------------------------------------------------------
# Pallas kernel: elementwise add of PE + (optional) inverted dropout.
#   seed_ref : SMEM (1,)   x_ref : (tb, tc)   pe_ref : (1, tc)   o_ref : (tb, tc)
# Grid is (col_tiles, row_tiles): program_id(0)=j (cols), program_id(1)=i (rows).
# ----------------------------------------------------------------------------
def _pe_kernel(seed_ref, x_ref, pe_ref, o_ref, *, apply_dropout, keep_thresh,
               scale, tb, tc, n_cols):
    y = x_ref[...] + pe_ref[...]                     # (tb,tc) + (1,tc) broadcast

    if apply_dropout:
        j = pl.program_id(0)                          # column-tile index (outer)
        i = pl.program_id(1)                          # row-tile index (inner)
        # TODO(synk): on real hardware pltpu.prng_seed/prng_random_bits would
        # roughly halve the VALU cost of this mask; the jnp-only counter hash is
        # kept so the kernel also lowers under the TPU interpreter.
        rows = (jax.lax.broadcasted_iota(jnp.int32, (tb, 1), 0)
                + i * tb).astype(jnp.uint32)          # (tb,1) — cheap
        cols = (jax.lax.broadcasted_iota(jnp.int32, (1, tc), 1)
                + j * tc).astype(jnp.uint32)          # (1,tc) — cheap
        # TODO(synk): the flat uint32 counter wraps for tensors with >2^32
        # elements; use a two-word (row, col) hash input for that regime.
        flat = rows * jnp.uint32(n_cols) + cols       # one full-width add
        seed_mix = seed_ref[0].astype(jnp.uint32) * jnp.uint32(0x9E3779B9)
        bits = _hash_u32(flat ^ seed_mix)
        keep = bits >= jnp.uint32(keep_thresh)        # P(keep) = 1 - p
        y = jnp.where(keep, y * jnp.asarray(scale, y.dtype), jnp.zeros_like(y))

    o_ref[...] = y.astype(o_ref.dtype)


# ----------------------------------------------------------------------------
# Wrapper: PositionalEncoding forward.
# ----------------------------------------------------------------------------
def positional_encoding_forward(x, pe, *, p=0.1, training=False, seed=0):
    """
    x : (B, S, E)
    pe: (1, max_len, E) precomputed buffer.
    Returns dropout(x + pe[:, :S], p) with inverted-dropout scaling when
    training=True; identity dropout when training=False.
    """
    B, S, E = x.shape
    max_len = pe.shape[1]
    assert S <= max_len, f"seq_len {S} exceeds max_len {max_len}"
    assert 0.0 <= p < 1.0, "dropout p must be in [0, 1)"

    SE = S * E
    x2 = x.reshape(B, SE)                              # lane-dense layout
    pe2 = pe[:, :S, :].reshape(1, SE).astype(x.dtype)

    itemsize = jnp.dtype(x.dtype).itemsize
    # Row tile: full batch extent when small, else a multiple of 8 capped at 32.
    tb = B if B <= 32 else 32
    # Column tile: as large as possible while the double-buffered footprint
    # 2 * (x + out + pe) blocks stays under ~28 MiB; cap at 65536 lanes.
    target_bytes = 28 * 1024 * 1024
    budget = target_bytes // (2 * (2 * tb + 1) * itemsize)
    tc_cap = min(65536, int(budget))
    if SE <= tc_cap:
        tc = SE                                        # full extent
    else:
        tc = max(128, (tc_cap // 128) * 128)           # multiple of 128

    apply_dropout = bool(training) and p > 0.0
    keep_thresh = min(int(round(p * 4294967296.0)), 4294967295) if apply_dropout else 0
    scale = 1.0 / (1.0 - p) if apply_dropout else 1.0

    kernel = functools.partial(
        _pe_kernel, apply_dropout=apply_dropout, keep_thresh=keep_thresh,
        scale=scale, tb=tb, tc=tc, n_cols=SE)

    # Column tiles outermost, row tiles innermost -> pe's block index (0, j) is
    # unchanged across consecutive steps and is not re-DMA'd.
    grid = (pl.cdiv(SE, tc), pl.cdiv(B, tb))
    seed_arr = jnp.array([seed], dtype=jnp.int32)

    grid_spec = pltpu.PrefetchScalarGridSpec(
        num_scalar_prefetch=1,                         # seed -> SMEM
        grid=grid,
        in_specs=[
            pl.BlockSpec((tb, tc), lambda j, i, seed: (i, j)),   # x
            pl.BlockSpec((1, tc), lambda j, i, seed: (0, j)),    # pe (bcast over B)
        ],
        out_specs=pl.BlockSpec((tb, tc), lambda j, i, seed: (i, j)),
    )

    out2 = pl.pallas_call(
        kernel,
        out_shape=jax.ShapeDtypeStruct((B, SE), x.dtype),
        grid_spec=grid_spec,
        compiler_params=pltpu.CompilerParams(
            dimension_semantics=("parallel", "parallel"),
            vmem_limit_bytes=40 * 1024 * 1024,         # > v5e's 16 MiB default,
        ),                                             # < v7x's 64 MiB physical
    )(seed_arr, x2, pe2)

    return out2.reshape(B, S, E)


# ----------------------------------------------------------------------------
# Main
# ----------------------------------------------------------------------------
if __name__ == "__main__":
    B, S, E = 2, 8, 32
    MAX_LEN = 64
    P_DROP = 0.1

    key = jax.random.PRNGKey(0)
    x = jax.random.normal(key, (B, S, E), dtype=jnp.float32)
    pe = build_pe(E, MAX_LEN)
    ref = x + pe[:, :S, :]

    # Eval mode (deterministic): dropout is identity -> verify against pure JAX.
    out_eval = positional_encoding_forward(x, pe, p=P_DROP, training=False)
    out_eval = jax.block_until_ready(out_eval)
    assert out_eval.shape == (B, S, E)
    assert jnp.allclose(out_eval, ref, atol=1e-6), "eval-mode mismatch"

    # Train mode: in-kernel stochastic dropout (inverted scaling).
    out_train = positional_encoding_forward(x, pe, p=P_DROP, training=True, seed=123)
    out_train = jax.block_until_ready(out_train)
    assert out_train.shape == (B, S, E)
    # Every element is either exactly 0 (dropped) or ref / (1 - p) (kept).
    scaled_ref = ref / (1.0 - P_DROP)
    ok = jnp.logical_or(
        out_train == 0.0,
        jnp.abs(out_train - scaled_ref) <= 1e-5 * (1.0 + jnp.abs(scaled_ref)),
    )
    assert bool(jnp.all(ok)), "train-mode mismatch"

    print("KERNEL_OK")
</pallas_src>

<mosaic_0001>
module attributes {stable_mosaic.version = 11 : i64} {
  func.func @_pe_kernel(%arg0: i32, %arg1: i32, %arg2: memref<1xi32, #tpu.memory_space<smem>>, %arg3: memref<2x256xf32, #tpu.memory_space<vmem>>, %arg4: memref<1x256xf32, #tpu.memory_space<vmem>>, %arg5: memref<2x256xf32, #tpu.memory_space<vmem>>) attributes {dimension_semantics = [#tpu.dimension_semantics<parallel>, #tpu.dimension_semantics<parallel>], iteration_bounds = array<i64: 1, 1>, scalar_prefetch = 1 : i64, scratch_operands = 0 : i64, tpu.core_type = #tpu.core_type<tc>, window_params = [{transform_indices = @transform_0, window_bounds = array<i64: 2, 256>}, {transform_indices = @transform_1, window_bounds = array<i64: 1, 256>}, {transform_indices = @transform_2, window_bounds = array<i64: 2, 256>}]} {
    %c0 = arith.constant 0 : index
    %c0_0 = arith.constant 0 : index
    %0 = vector.load %arg3[%c0, %c0_0] : memref<2x256xf32, #tpu.memory_space<vmem>>, vector<2x256xf32>
    %c0_1 = arith.constant 0 : index
    %c0_2 = arith.constant 0 : index
    %1 = vector.load %arg4[%c0_1, %c0_2] : memref<1x256xf32, #tpu.memory_space<vmem>>, vector<1x256xf32>
    %2 = vector.broadcast %1 : vector<1x256xf32> to vector<2x256xf32>
    %3 = arith.addf %0, %2 : vector<2x256xf32>
    %c0_3 = arith.constant 0 : index
    %c0_4 = arith.constant 0 : index
    %4 = vector.load %arg5[%c0_3, %c0_4] : memref<2x256xf32, #tpu.memory_space<vmem>>, vector<2x256xf32>
    tpu.vector_store %arg5[%c0_3, %c0_4], %3 {strides = array<i32>} : memref<2x256xf32, #tpu.memory_space<vmem>>, vector<2x256xf32>,
    return
  }
  func.func @transform_0(%arg0: i32, %arg1: i32, %arg2: memref<1xi32, #tpu.memory_space<smem>>) -> (i32, i32) {
    %c0_i32 = arith.constant 0 : i32
    return %arg1, %arg0 : i32, i32
  }
  func.func @transform_1(%arg0: i32, %arg1: i32, %arg2: memref<1xi32, #tpu.memory_space<smem>>) -> (i32, i32) {
    %c0_i32 = arith.constant 0 : i32
    %c0_i32_0 = arith.constant 0 : i32
    return %c0_i32, %arg0 : i32, i32
  }
  func.func @transform_2(%arg0: i32, %arg1: i32, %arg2: memref<1xi32, #tpu.memory_space<smem>>) -> (i32, i32) {
    %c0_i32 = arith.constant 0 : i32
    return %arg1, %arg0 : i32, i32
  }
}

</mosaic_0001>

<llo_original>
// kernel: tpu_custom_call.1
$region0: #{tpu_custom_call.1}
  #allocation0 [shape = 'u32[]', space=smem, size = 0x4, offset = 0x4, fixed_abs, tag = 'smem constant byte address 0x4 - core index']
  #allocation1 [shape = 'u32[144,128]{1,0:T(1,128)}', space=vmem, size = 0x12000, scoped, tag = 'internal scratch']
  #allocation2 [shape = 's32[1]{0}', space=sflag, size = 0x4, scoped, tag = 'scoped memory for tpu_custom_call.1']
  #allocation3 [shape = 's32[1]{0:T(128)S(6)}', space=smem, size = 0x200, scoped, tag = 'prefetched SMEM operand 0']
  %s0 = inlined_call_operand.<no memory space> [shape: s32[1], index: 0, kind: input, shape index: {}]
  %s1 = inlined_call_operand.hbm [shape: f32[2,256], index: 1, kind: input, shape index: {}]
  %s2 = inlined_call_operand.vmem [shape: f32[1,256], index: 2, kind: input, shape index: {}]
  %s3 = inlined_call_operand.hbm [shape: f32[2,256], index: 3, kind: output, shape index: {}]
  %s4 = sld [smem:[#allocation0]]
  $region22: #{tpu_custom_call.1} parent=0
    _
  %s6 = ssub.s32 1, %s4
  %s7 = scalar_select 0, %s6, %s4
  %8 = sst [smem:[#allocation3]] %s0
  $region1: #{tpu_custom_call.1} parent=0
    #allocation4 [shape = 'u8[2048]{0}', space=vmem, size = 0x800, scoped, tag = 'input window, operand 1, single buffered']
    #allocation5 [shape = 's32[1]{0}', space=sflag, size = 0x4, scoped, tag = 'scoped memory for tpu_custom_call.1']
    #allocation6 [shape = 's32[1]{0}', space=sflag, size = 0x4, scoped, tag = 'scoped memory for tpu_custom_call.1']
    #allocation7 [shape = 'u8[2048]{0}', space=vmem, size = 0x800, scoped, tag = 'output window, operand 0, single buffered']
    %9 = vsyncpa [#allocation5], 0
    %10 = vsyncpa [#allocation6], 0
    // Predicated region
    $region2: #{tpu_custom_call.1} parent=1 // pred_check
      _
    $region3: #{tpu_custom_call.1} parent=1 // pred_check_branch
      %12 = sbr.rel (0) target = $region5
    $region4: #{tpu_custom_call.1} parent=1 // pred_region
      %s14 = ssub.s32 64, 64
      %15 = vsyncadd [#allocation5], %s14
      %s17 = sshll.u32 [#allocation4], 4
      %s18 = int_to_ptr.vmem [resolvable:$true] %s17
      %20 = dma.hbm_to_vmem [thread:$0]  %s1, 64, %s18, [#allocation5]
    $region5: #{tpu_custom_call.1} parent=1 // pred_fallthru
      _
    // Predicated region
    $region6: #{tpu_custom_call.1} parent=1 // pred_check
      _
    $region7: #{tpu_custom_call.1} parent=1 // pred_check_branch
      %22 = sbr.rel (0) target = $region9
    $region8: #{tpu_custom_call.1} parent=1 // pred_region
      _
    $region9: #{tpu_custom_call.1} parent=1 // pred_fallthru
      _
    // Predicated region
    $region10: #{tpu_custom_call.1} parent=1 // pred_check
      _
    $region11: #{tpu_custom_call.1} parent=1 // pred_check_branch
      %24 = sbr.rel (0) target = $region13
    $region12: #{tpu_custom_call.1} parent=1 // pred_region
      %25 = dma.done [#allocation5], 64
    $region13: #{tpu_custom_call.1} parent=1 // pred_fallthru
      _
    %v26 = vld [vmem:[#allocation4] sm:$0xf]
    %v27 = vld [vmem:[%s2] sm:$0x3]
    %v29 = vlaneseq
    %v30 = vshrl.u32 %v29, 7
    %v31 = vsub.s32 0, %v30
    %v32 = vrot.slane %v27, %v31
    %v33 = vlaneseq
    %v34 = vshrl.u32 %v33, 7
    %v35 = vsub.s32 1, %v34
    %v36 = vrot.slane %v27, %v35
    %v37 = vcombine.low %v32, %v36
    %v39 = vunpack.c.l.s4 1983009808
    %v40 = vunpack.c.0.s8 %v39
    %v41 = vlaneseq
    %v42 = vshrl.u32 %v41, 7
    %v43 = vsub.s32 %v40, %v42
    %v44 = vrot.slane %v37, %v43
    %v46 = vadd.f32 %v26, %v44
    %47 = vst [vmem:[#allocation7] sm:$0xf] %v46
    // Predicated region
    $region14: #{tpu_custom_call.1} parent=1 // pred_check
      _
    $region15: #{tpu_custom_call.1} parent=1 // pred_check_branch
      %49 = sbr.rel (0) target = $region17
    $region16: #{tpu_custom_call.1} parent=1 // pred_region
      %s51 = ssub.s32 64, 64
      %52 = vsyncadd [#allocation6], %s51
      %s54 = sshll.u32 [#allocation7], 4
      %s55 = int_to_ptr.vmem [resolvable:$true] %s54
      %57 = dma.vmem_to_hbm [thread:$0]  %s55, 64, %s3, [#allocation6]
    $region17: #{tpu_custom_call.1} parent=1 // pred_fallthru
      _
    // Predicated region
    $region18: #{tpu_custom_call.1} parent=1 // pred_check
      _
    $region19: #{tpu_custom_call.1} parent=1 // pred_check_branch
      %59 = sbr.rel (0) target = $region21
    $region20: #{tpu_custom_call.1} parent=1 // pred_region
      %60 = dma.done [#allocation6], 64
    $region21: #{tpu_custom_call.1} parent=1 // pred_fallthru
      _
    %61 = vsyncpa [#allocation5], 1
    %62 = vsyncpa [#allocation6], 1

</llo_original>
